<compile_context>
chip_gen: v7x
topology: tpu7x:2x2x1
jax: 0.10.0
libtpu: 0.0.40
codegen_flags: <defaults>
</compile_context>

<pallas_src>
import functools

import jax
import jax.numpy as jnp
from jax.experimental import pallas as pl
from jax.experimental.pallas import tpu as pltpu

EPS = 1e-5
LANE = 128
_VMEM = pl.BlockSpec(memory_space=pltpu.MemorySpace.VMEM)


# ------------------------------ Pallas kernel -------------------------------

def _byol_fused_kernel(
    xy_ref,                                                    # (2B, C, H*W)
    # online backend (GAP + Linear)
    obw_ref, obb_ref,
    # online projection MLP
    opw1_ref, opb1_ref, opg_ref, opbe_ref, opw2_ref, opb2_ref,
    # online predictor MLP (final Linear zero-padded to LANE)
    prw1_ref, prb1_ref, prg_ref, prbe_ref, prw2_ref, prb2_ref,
    # target backend (GAP + Linear)
    tbw_ref, tbb_ref,
    # target projection MLP (final Linear zero-padded to LANE)
    tpw1_ref, tpb1_ref, tpg_ref, tpbe_ref, tpw2_ref, tpb2_ref,
    # outputs
    on_ref, tg_ref,
    *, batch_per_view,
):
    def linear(x_f32, w_ref, b_ref):
        # bf16 operands on the MXU, f32 accumulation, f32 bias add on the VPU.
        return (
            jnp.dot(x_f32.astype(jnp.bfloat16), w_ref[...],
                    preferred_element_type=jnp.float32)
            + b_ref[...]
        )

    def bn_relu_one_view(h, g, be):
        # BatchNorm1d training mode: biased batch statistics, then ReLU (f32).
        mu = jnp.mean(h, axis=0, keepdims=True)
        var = jnp.mean((h - mu) ** 2, axis=0, keepdims=True)
        hn = (h - mu) * jax.lax.rsqrt(var + EPS) * g + be
        return jnp.maximum(hn, 0.0)

    def bn_relu(h, g_ref, be_ref):
        # The two views are batched through the matmuls, but BN statistics are
        # computed per view to exactly match separate net(x)/net(y) calls of
        # the reference module. (Any future batch tiling must keep this.)
        g, be = g_ref[...], be_ref[...]
        top = bn_relu_one_view(h[:batch_per_view], g, be)
        bot = bn_relu_one_view(h[batch_per_view:], g, be)
        return jnp.concatenate([top, bot], axis=0)

    def mlp(x, w1_ref, b1_ref, g_ref, be_ref, w2_ref, b2_ref):
        # Linear -> BatchNorm1d(train) -> ReLU -> Linear.
        h = linear(x, w1_ref, b1_ref)
        return linear(bn_relu(h, g_ref, be_ref), w2_ref, b2_ref)

    # Synthetic backbone step 1: global average pool over the spatial axis.
    # (H*W = 256 here is lane-aligned, so this XLU reduction is cheap.)
    feat = jnp.mean(xy_ref[...], axis=-1)                      # (2B, C) f32

    # ---- online branch: backend -> projection MLP -> predictor MLP ----
    f_on = linear(feat, obw_ref, obb_ref)                      # (2B, F)
    p_on = mlp(f_on, opw1_ref, opb1_ref, opg_ref, opbe_ref,
               opw2_ref, opb2_ref)                             # (2B, OUT)
    on_ref[...] = mlp(p_on, prw1_ref, prb1_ref, prg_ref, prbe_ref,
                      prw2_ref, prb2_ref)                      # (2B, LANE)

    # ---- target branch: backend -> projection MLP ----
    f_tg = linear(feat, tbw_ref, tbb_ref)                      # (2B, F)
    tg_ref[...] = mlp(f_tg, tpw1_ref, tpb1_ref, tpg_ref, tpbe_ref,
                      tpw2_ref, tpb2_ref)                      # (2B, LANE)


# ------------------------------- JAX wrapper ---------------------------------

@jax.jit
def byol_forward(params, x, y):
    """Returns (xOn, yOn, xTg, yTg) as in BYOL.forward (closedForm=False)."""
    B, C, H, W = x.shape
    out_dim = params["on_proj"]["w2"].shape[1]     # real (unpadded) OUTPUT_SIZE
    out_pad = params["on_pred"]["w2"].shape[1]     # lane-dense padded width

    # Batch both views through the same weights: (2B, C, H*W).
    xy = jnp.concatenate([x, y], axis=0).reshape(2 * B, C, H * W)
    xy = xy.astype(jnp.float32)

    flat_inputs = [
        xy,
        params["on_backend"]["w"], params["on_backend"]["b"],
        params["on_proj"]["w1"], params["on_proj"]["b1"],
        params["on_proj"]["gamma"], params["on_proj"]["beta"],
        params["on_proj"]["w2"], params["on_proj"]["b2"],
        params["on_pred"]["w1"], params["on_pred"]["b1"],
        params["on_pred"]["gamma"], params["on_pred"]["beta"],
        params["on_pred"]["w2"], params["on_pred"]["b2"],
        params["tg_backend"]["w"], params["tg_backend"]["b"],
        params["tg_proj"]["w1"], params["tg_proj"]["b1"],
        params["tg_proj"]["gamma"], params["tg_proj"]["beta"],
        params["tg_proj"]["w2"], params["tg_proj"]["b2"],
    ]

    on_pad_out, tg_pad_out = pl.pallas_call(
        functools.partial(_byol_fused_kernel, batch_per_view=B),
        out_shape=(
            jax.ShapeDtypeStruct((2 * B, out_pad), jnp.float32),
            jax.ShapeDtypeStruct((2 * B, out_pad), jnp.float32),
        ),
        in_specs=[_VMEM] * len(flat_inputs),
        out_specs=(_VMEM, _VMEM),
        compiler_params=pltpu.CompilerParams(
            vmem_limit_bytes=32 * 1024 * 1024),
    )(*flat_inputs)

    # Slice away the zero padding and split the two views.
    xOn, yOn = on_pad_out[:B, :out_dim], on_pad_out[B:, :out_dim]
    xTg, yTg = tg_pad_out[:B, :out_dim], tg_pad_out[B:, :out_dim]
    return xOn, yOn, xTg, yTg


# --------------------------- parameter creation ------------------------------

def _round_up(n, m):
    return ((n + m - 1) // m) * m


def _linear_init(key, fan_in, fan_out, pad_out_to=None):
    # PyTorch nn.Linear default init: U(-1/sqrt(fan_in), 1/sqrt(fan_in)).
    kw, kb = jax.random.split(key)
    bound = 1.0 / jnp.sqrt(float(fan_in))
    w = jax.random.uniform(kw, (fan_in, fan_out), jnp.float32, -bound, bound)
    b = jax.random.uniform(kb, (1, fan_out), jnp.float32, -bound, bound)
    if pad_out_to is not None and pad_out_to > fan_out:
        # Zero-pad the output dim so kernel stores are lane-dense; padded
        # columns produce exact zeros and are sliced off in the wrapper.
        w = jnp.pad(w, ((0, 0), (0, pad_out_to - fan_out)))
        b = jnp.pad(b, ((0, 0), (0, pad_out_to - fan_out)))
    # Weights in bf16 for the MXU; biases stay f32 (added after f32 accum).
    return w.astype(jnp.bfloat16), b


def make_backend_params(key, in_ch, feat_dim):
    w, b = _linear_init(key, in_ch, feat_dim)
    return {"w": w, "b": b}


def make_mlp_params(key, in_dim, hidden_dim, out_dim, pad_output_to=None):
    k1, k2 = jax.random.split(key)
    w1, b1 = _linear_init(k1, in_dim, hidden_dim)
    w2, b2 = _linear_init(k2, hidden_dim, out_dim, pad_out_to=pad_output_to)
    return {
        "w1": w1, "b1": b1,
        "gamma": jnp.ones((1, hidden_dim), jnp.float32),
        "beta": jnp.zeros((1, hidden_dim), jnp.float32),
        "w2": w2, "b2": b2,
    }


def make_byol_params(key, in_ch, input_size, hidden_size, output_size):
    out_pad = _round_up(output_size, LANE)
    keys = jax.random.split(key, 5)
    return {
        "on_backend": make_backend_params(keys[0], in_ch, input_size),
        "on_proj": make_mlp_params(keys[1], input_size, hidden_size,
                                   output_size),
        "on_pred": make_mlp_params(keys[2], output_size, hidden_size,
                                   output_size, pad_output_to=out_pad),
        "tg_backend": make_backend_params(keys[3], in_ch, input_size),
        "tg_proj": make_mlp_params(keys[4], input_size, hidden_size,
                                   output_size, pad_output_to=out_pad),
    }


# ---------------------------------- main -------------------------------------

if __name__ == "__main__":
    # Small shapes consistent with the module's forward:
    # two image views x, y of shape (B, C, H, W); feature dims scaled down.
    B, C, H, W = 2, 4, 16, 16
    INPUT_SIZE, HIDDEN_SIZE, OUTPUT_SIZE = 32, 64, 16

    key = jax.random.PRNGKey(0)
    kx, ky, kp = jax.random.split(key, 3)
    x = jax.random.normal(kx, (B, C, H, W), jnp.float32)
    y = jax.random.normal(ky, (B, C, H, W), jnp.float32)

    params = make_byol_params(kp, C, INPUT_SIZE, HIDDEN_SIZE, OUTPUT_SIZE)

    xOn, yOn, xTg, yTg = byol_forward(params, x, y)
    jax.block_until_ready((xOn, yOn, xTg, yTg))

    assert xOn.shape == (B, OUTPUT_SIZE)
    assert yOn.shape == (B, OUTPUT_SIZE)
    assert xTg.shape == (B, OUTPUT_SIZE)
    assert yTg.shape == (B, OUTPUT_SIZE)
    assert jnp.all(jnp.isfinite(xOn)) and jnp.all(jnp.isfinite(yTg))
    print("KERNEL_OK")
</pallas_src>

<mosaic_0001>
module attributes {stable_mosaic.version = 11 : i64} {
  func.func @_byol_fused_kernel(%arg0: memref<4x4x256xf32, #tpu.memory_space<vmem>>, %arg1: memref<4x32xbf16, #tpu.memory_space<vmem>>, %arg2: memref<1x32xf32, #tpu.memory_space<vmem>>, %arg3: memref<32x64xbf16, #tpu.memory_space<vmem>>, %arg4: memref<1x64xf32, #tpu.memory_space<vmem>>, %arg5: memref<1x64xf32, #tpu.memory_space<vmem>>, %arg6: memref<1x64xf32, #tpu.memory_space<vmem>>, %arg7: memref<64x16xbf16, #tpu.memory_space<vmem>>, %arg8: memref<1x16xf32, #tpu.memory_space<vmem>>, %arg9: memref<16x64xbf16, #tpu.memory_space<vmem>>, %arg10: memref<1x64xf32, #tpu.memory_space<vmem>>, %arg11: memref<1x64xf32, #tpu.memory_space<vmem>>, %arg12: memref<1x64xf32, #tpu.memory_space<vmem>>, %arg13: memref<64x128xbf16, #tpu.memory_space<vmem>>, %arg14: memref<1x128xf32, #tpu.memory_space<vmem>>, %arg15: memref<4x32xbf16, #tpu.memory_space<vmem>>, %arg16: memref<1x32xf32, #tpu.memory_space<vmem>>, %arg17: memref<32x64xbf16, #tpu.memory_space<vmem>>, %arg18: memref<1x64xf32, #tpu.memory_space<vmem>>, %arg19: memref<1x64xf32, #tpu.memory_space<vmem>>, %arg20: memref<1x64xf32, #tpu.memory_space<vmem>>, %arg21: memref<64x128xbf16, #tpu.memory_space<vmem>>, %arg22: memref<1x128xf32, #tpu.memory_space<vmem>>, %arg23: memref<4x128xf32, #tpu.memory_space<vmem>>, %arg24: memref<4x128xf32, #tpu.memory_space<vmem>>) attributes {dimension_semantics = [], scalar_prefetch = 0 : i64, scratch_operands = 0 : i64, tpu.core_type = #tpu.core_type<tc>} {
    %c0 = arith.constant 0 : index
    %c0_0 = arith.constant 0 : index
    %c0_1 = arith.constant 0 : index
    %0 = vector.load %arg0[%c0, %c0_0, %c0_1] : memref<4x4x256xf32, #tpu.memory_space<vmem>>, vector<4x4x256xf32>
    %cst = arith.constant dense<0.000000e+00> : vector<4x4xf32>
    %1 = vector.multi_reduction <add>, %0, %cst [2] : vector<4x4x256xf32> to vector<4x4xf32>
    %cst_2 = arith.constant 2.560000e+02 : f32
    %2 = vector.broadcast %cst_2 : f32 to vector<4x4xf32>
    %3 = arith.divf %1, %2 : vector<4x4xf32>
    %4 = arith.truncf %3 : vector<4x4xf32> to vector<4x4xbf16>
    %c0_3 = arith.constant 0 : index
    %c0_4 = arith.constant 0 : index
    %5 = vector.load %arg1[%c0_3, %c0_4] : memref<4x32xbf16, #tpu.memory_space<vmem>>, vector<4x32xbf16>
    %cst_5 = arith.constant dense<0.000000e+00> : vector<4x32xf32>
    %6 = tpu.matmul %4, %5, %cst_5 {dimension_numbers = #tpu.dot_dimension_numbers<[1], [0], [0], [1], [0, 0, 1, 1], [], []>} : vector<4x4xbf16>, vector<4x32xbf16>, vector<4x32xf32> -> vector<4x32xf32>
    %c0_6 = arith.constant 0 : index
    %c0_7 = arith.constant 0 : index
    %7 = vector.load %arg2[%c0_6, %c0_7] : memref<1x32xf32, #tpu.memory_space<vmem>>, vector<1x32xf32>
    %8 = vector.broadcast %7 : vector<1x32xf32> to vector<4x32xf32>
    %9 = arith.addf %6, %8 : vector<4x32xf32>
    %10 = arith.truncf %9 : vector<4x32xf32> to vector<4x32xbf16>
    %c0_8 = arith.constant 0 : index
    %c0_9 = arith.constant 0 : index
    %11 = vector.load %arg3[%c0_8, %c0_9] : memref<32x64xbf16, #tpu.memory_space<vmem>>, vector<32x64xbf16>
    %cst_10 = arith.constant dense<0.000000e+00> : vector<4x64xf32>
    %12 = tpu.matmul %10, %11, %cst_10 {dimension_numbers = #tpu.dot_dimension_numbers<[1], [0], [0], [1], [0, 0, 1, 1], [], []>} : vector<4x32xbf16>, vector<32x64xbf16>, vector<4x64xf32> -> vector<4x64xf32>
    %c0_11 = arith.constant 0 : index
    %c0_12 = arith.constant 0 : index
    %13 = vector.load %arg4[%c0_11, %c0_12] : memref<1x64xf32, #tpu.memory_space<vmem>>, vector<1x64xf32>
    %14 = vector.broadcast %13 : vector<1x64xf32> to vector<4x64xf32>
    %15 = arith.addf %12, %14 : vector<4x64xf32>
    %c0_13 = arith.constant 0 : index
    %c0_14 = arith.constant 0 : index
    %16 = vector.load %arg5[%c0_13, %c0_14] : memref<1x64xf32, #tpu.memory_space<vmem>>, vector<1x64xf32>
    %c0_15 = arith.constant 0 : index
    %c0_16 = arith.constant 0 : index
    %17 = vector.load %arg6[%c0_15, %c0_16] : memref<1x64xf32, #tpu.memory_space<vmem>>, vector<1x64xf32>
    %18 = vector.extract_strided_slice %15 {offsets = [0, 0], sizes = [2, 64], strides = [1, 1]} : vector<4x64xf32> to vector<2x64xf32>
    %cst_17 = arith.constant dense<0.000000e+00> : vector<64xf32>
    %19 = vector.multi_reduction <add>, %18, %cst_17 [0] : vector<2x64xf32> to vector<64xf32>
    %20 = vector.shape_cast %19 : vector<64xf32> to vector<1x64xf32>
    %cst_18 = arith.constant 2.000000e+00 : f32
    %21 = vector.broadcast %cst_18 : f32 to vector<1x64xf32>
    %22 = arith.divf %20, %21 : vector<1x64xf32>
    %23 = vector.broadcast %22 : vector<1x64xf32> to vector<2x64xf32>
    %24 = arith.subf %18, %23 : vector<2x64xf32>
    %25 = arith.mulf %24, %24 : vector<2x64xf32>
    %cst_19 = arith.constant dense<0.000000e+00> : vector<64xf32>
    %26 = vector.multi_reduction <add>, %25, %cst_19 [0] : vector<2x64xf32> to vector<64xf32>
    %27 = vector.shape_cast %26 : vector<64xf32> to vector<1x64xf32>
    %cst_20 = arith.constant 2.000000e+00 : f32
    %28 = vector.broadcast %cst_20 : f32 to vector<1x64xf32>
    %29 = arith.divf %27, %28 : vector<1x64xf32>
    %30 = vector.broadcast %22 : vector<1x64xf32> to vector<2x64xf32>
    %31 = arith.subf %18, %30 : vector<2x64xf32>
    %cst_21 = arith.constant 9.99999974E-6 : f32
    %32 = vector.broadcast %cst_21 : f32 to vector<1x64xf32>
    %33 = arith.addf %29, %32 : vector<1x64xf32>
    %34 = math.rsqrt %33 : vector<1x64xf32>
    %35 = vector.broadcast %34 : vector<1x64xf32> to vector<2x64xf32>
    %36 = arith.mulf %31, %35 : vector<2x64xf32>
    %37 = vector.broadcast %16 : vector<1x64xf32> to vector<2x64xf32>
    %38 = arith.mulf %36, %37 : vector<2x64xf32>
    %39 = vector.broadcast %17 : vector<1x64xf32> to vector<2x64xf32>
    %40 = arith.addf %38, %39 : vector<2x64xf32>
    %cst_22 = arith.constant 0.000000e+00 : f32
    %41 = vector.broadcast %cst_22 : f32 to vector<2x64xf32>
    %42 = arith.maximumf %40, %41 : vector<2x64xf32>
    %43 = vector.extract_strided_slice %15 {offsets = [2, 0], sizes = [2, 64], strides = [1, 1]} : vector<4x64xf32> to vector<2x64xf32>
    %cst_23 = arith.constant dense<0.000000e+00> : vector<64xf32>
    %44 = vector.multi_reduction <add>, %43, %cst_23 [0] : vector<2x64xf32> to vector<64xf32>
    %45 = vector.shape_cast %44 : vector<64xf32> to vector<1x64xf32>
    %cst_24 = arith.constant 2.000000e+00 : f32
    %46 = vector.broadcast %cst_24 : f32 to vector<1x64xf32>
    %47 = arith.divf %45, %46 : vector<1x64xf32>
    %48 = vector.broadcast %47 : vector<1x64xf32> to vector<2x64xf32>
    %49 = arith.subf %43, %48 : vector<2x64xf32>
    %50 = arith.mulf %49, %49 : vector<2x64xf32>
    %cst_25 = arith.constant dense<0.000000e+00> : vector<64xf32>
    %51 = vector.multi_reduction <add>, %50, %cst_25 [0] : vector<2x64xf32> to vector<64xf32>
    %52 = vector.shape_cast %51 : vector<64xf32> to vector<1x64xf32>
    %cst_26 = arith.constant 2.000000e+00 : f32
    %53 = vector.broadcast %cst_26 : f32 to vector<1x64xf32>
    %54 = arith.divf %52, %53 : vector<1x64xf32>
    %55 = vector.broadcast %47 : vector<1x64xf32> to vector<2x64xf32>
    %56 = arith.subf %43, %55 : vector<2x64xf32>
    %cst_27 = arith.constant 9.99999974E-6 : f32
    %57 = vector.broadcast %cst_27 : f32 to vector<1x64xf32>
    %58 = arith.addf %54, %57 : vector<1x64xf32>
    %59 = math.rsqrt %58 : vector<1x64xf32>
    %60 = vector.broadcast %59 : vector<1x64xf32> to vector<2x64xf32>
    %61 = arith.mulf %56, %60 : vector<2x64xf32>
    %62 = vector.broadcast %16 : vector<1x64xf32> to vector<2x64xf32>
    %63 = arith.mulf %61, %62 : vector<2x64xf32>
    %64 = vector.broadcast %17 : vector<1x64xf32> to vector<2x64xf32>
    %65 = arith.addf %63, %64 : vector<2x64xf32>
    %cst_28 = arith.constant 0.000000e+00 : f32
    %66 = vector.broadcast %cst_28 : f32 to vector<2x64xf32>
    %67 = arith.maximumf %65, %66 : vector<2x64xf32>
    %68 = tpu.concatenate %42, %67 in 0 : vector<2x64xf32>, vector<2x64xf32> -> vector<4x64xf32>
    %69 = arith.truncf %68 : vector<4x64xf32> to vector<4x64xbf16>
    %c0_29 = arith.constant 0 : index
    %c0_30 = arith.constant 0 : index
    %70 = vector.load %arg7[%c0_29, %c0_30] : memref<64x16xbf16, #tpu.memory_space<vmem>>, vector<64x16xbf16>
    %cst_31 = arith.constant dense<0.000000e+00> : vector<4x16xf32>
    %71 = tpu.matmul %69, %70, %cst_31 {dimension_numbers = #tpu.dot_dimension_numbers<[1], [0], [0], [1], [0, 0, 1, 1], [], []>} : vector<4x64xbf16>, vector<64x16xbf16>, vector<4x16xf32> -> vector<4x16xf32>
    %c0_32 = arith.constant 0 : index
    %c0_33 = arith.constant 0 : index
    %72 = vector.load %arg8[%c0_32, %c0_33] : memref<1x16xf32, #tpu.memory_space<vmem>>, vector<1x16xf32>
    %73 = vector.broadcast %72 : vector<1x16xf32> to vector<4x16xf32>
    %74 = arith.addf %71, %73 : vector<4x16xf32>
    %75 = arith.truncf %74 : vector<4x16xf32> to vector<4x16xbf16>
    %c0_34 = arith.constant 0 : index
    %c0_35 = arith.constant 0 : index
    %76 = vector.load %arg9[%c0_34, %c0_35] : memref<16x64xbf16, #tpu.memory_space<vmem>>, vector<16x64xbf16>
    %cst_36 = arith.constant dense<0.000000e+00> : vector<4x64xf32>
    %77 = tpu.matmul %75, %76, %cst_36 {dimension_numbers = #tpu.dot_dimension_numbers<[1], [0], [0], [1], [0, 0, 1, 1], [], []>} : vector<4x16xbf16>, vector<16x64xbf16>, vector<4x64xf32> -> vector<4x64xf32>
    %c0_37 = arith.constant 0 : index
    %c0_38 = arith.constant 0 : index
    %78 = vector.load %arg10[%c0_37, %c0_38] : memref<1x64xf32, #tpu.memory_space<vmem>>, vector<1x64xf32>
    %79 = vector.broadcast %78 : vector<1x64xf32> to vector<4x64xf32>
    %80 = arith.addf %77, %79 : vector<4x64xf32>
    %c0_39 = arith.constant 0 : index
    %c0_40 = arith.constant 0 : index
    %81 = vector.load %arg11[%c0_39, %c0_40] : memref<1x64xf32, #tpu.memory_space<vmem>>, vector<1x64xf32>
    %c0_41 = arith.constant 0 : index
    %c0_42 = arith.constant 0 : index
    %82 = vector.load %arg12[%c0_41, %c0_42] : memref<1x64xf32, #tpu.memory_space<vmem>>, vector<1x64xf32>
    %83 = vector.extract_strided_slice %80 {offsets = [0, 0], sizes = [2, 64], strides = [1, 1]} : vector<4x64xf32> to vector<2x64xf32>
    %cst_43 = arith.constant dense<0.000000e+00> : vector<64xf32>
    %84 = vector.multi_reduction <add>, %83, %cst_43 [0] : vector<2x64xf32> to vector<64xf32>
    %85 = vector.shape_cast %84 : vector<64xf32> to vector<1x64xf32>
    %cst_44 = arith.constant 2.000000e+00 : f32
    %86 = vector.broadcast %cst_44 : f32 to vector<1x64xf32>
    %87 = arith.divf %85, %86 : vector<1x64xf32>
    %88 = vector.broadcast %87 : vector<1x64xf32> to vector<2x64xf32>
    %89 = arith.subf %83, %88 : vector<2x64xf32>
    %90 = arith.mulf %89, %89 : vector<2x64xf32>
    %cst_45 = arith.constant dense<0.000000e+00> : vector<64xf32>
    %91 = vector.multi_reduction <add>, %90, %cst_45 [0] : vector<2x64xf32> to vector<64xf32>
    %92 = vector.shape_cast %91 : vector<64xf32> to vector<1x64xf32>
    %cst_46 = arith.constant 2.000000e+00 : f32
    %93 = vector.broadcast %cst_46 : f32 to vector<1x64xf32>
    %94 = arith.divf %92, %93 : vector<1x64xf32>
    %95 = vector.broadcast %87 : vector<1x64xf32> to vector<2x64xf32>
    %96 = arith.subf %83, %95 : vector<2x64xf32>
    %cst_47 = arith.constant 9.99999974E-6 : f32
    %97 = vector.broadcast %cst_47 : f32 to vector<1x64xf32>
    %98 = arith.addf %94, %97 : vector<1x64xf32>
    %99 = math.rsqrt %98 : vector<1x64xf32>
    %100 = vector.broadcast %99 : vector<1x64xf32> to vector<2x64xf32>
    %101 = arith.mulf %96, %100 : vector<2x64xf32>
    %102 = vector.broadcast %81 : vector<1x64xf32> to vector<2x64xf32>
    %103 = arith.mulf %101, %102 : vector<2x64xf32>
    %104 = vector.broadcast %82 : vector<1x64xf32> to vector<2x64xf32>
    %105 = arith.addf %103, %104 : vector<2x64xf32>
    %cst_48 = arith.constant 0.000000e+00 : f32
    %106 = vector.broadcast %cst_48 : f32 to vector<2x64xf32>
    %107 = arith.maximumf %105, %106 : vector<2x64xf32>
    %108 = vector.extract_strided_slice %80 {offsets = [2, 0], sizes = [2, 64], strides = [1, 1]} : vector<4x64xf32> to vector<2x64xf32>
    %cst_49 = arith.constant dense<0.000000e+00> : vector<64xf32>
    %109 = vector.multi_reduction <add>, %108, %cst_49 [0] : vector<2x64xf32> to vector<64xf32>
    %110 = vector.shape_cast %109 : vector<64xf32> to vector<1x64xf32>
    %cst_50 = arith.constant 2.000000e+00 : f32
    %111 = vector.broadcast %cst_50 : f32 to vector<1x64xf32>
    %112 = arith.divf %110, %111 : vector<1x64xf32>
    %113 = vector.broadcast %112 : vector<1x64xf32> to vector<2x64xf32>
    %114 = arith.subf %108, %113 : vector<2x64xf32>
    %115 = arith.mulf %114, %114 : vector<2x64xf32>
    %cst_51 = arith.constant dense<0.000000e+00> : vector<64xf32>
    %116 = vector.multi_reduction <add>, %115, %cst_51 [0] : vector<2x64xf32> to vector<64xf32>
    %117 = vector.shape_cast %116 : vector<64xf32> to vector<1x64xf32>
    %cst_52 = arith.constant 2.000000e+00 : f32
    %118 = vector.broadcast %cst_52 : f32 to vector<1x64xf32>
    %119 = arith.divf %117, %118 : vector<1x64xf32>
    %120 = vector.broadcast %112 : vector<1x64xf32> to vector<2x64xf32>
    %121 = arith.subf %108, %120 : vector<2x64xf32>
    %cst_53 = arith.constant 9.99999974E-6 : f32
    %122 = vector.broadcast %cst_53 : f32 to vector<1x64xf32>
    %123 = arith.addf %119, %122 : vector<1x64xf32>
    %124 = math.rsqrt %123 : vector<1x64xf32>
    %125 = vector.broadcast %124 : vector<1x64xf32> to vector<2x64xf32>
    %126 = arith.mulf %121, %125 : vector<2x64xf32>
    %127 = vector.broadcast %81 : vector<1x64xf32> to vector<2x64xf32>
    %128 = arith.mulf %126, %127 : vector<2x64xf32>
    %129 = vector.broadcast %82 : vector<1x64xf32> to vector<2x64xf32>
    %130 = arith.addf %128, %129 : vector<2x64xf32>
    %cst_54 = arith.constant 0.000000e+00 : f32
    %131 = vector.broadcast %cst_54 : f32 to vector<2x64xf32>
    %132 = arith.maximumf %130, %131 : vector<2x64xf32>
    %133 = tpu.concatenate %107, %132 in 0 : vector<2x64xf32>, vector<2x64xf32> -> vector<4x64xf32>
    %134 = arith.truncf %133 : vector<4x64xf32> to vector<4x64xbf16>
    %c0_55 = arith.constant 0 : index
    %c0_56 = arith.constant 0 : index
    %135 = vector.load %arg13[%c0_55, %c0_56] : memref<64x128xbf16, #tpu.memory_space<vmem>>, vector<64x128xbf16>
    %cst_57 = arith.constant dense<0.000000e+00> : vector<4x128xf32>
    %136 = tpu.matmul %134, %135, %cst_57 {dimension_numbers = #tpu.dot_dimension_numbers<[1], [0], [0], [1], [0, 0, 1, 1], [], []>} : vector<4x64xbf16>, vector<64x128xbf16>, vector<4x128xf32> -> vector<4x128xf32>
    %c0_58 = arith.constant 0 : index
    %c0_59 = arith.constant 0 : index
    %137 = vector.load %arg14[%c0_58, %c0_59] : memref<1x128xf32, #tpu.memory_space<vmem>>, vector<1x128xf32>
    %138 = vector.broadcast %137 : vector<1x128xf32> to vector<4x128xf32>
    %139 = arith.addf %136, %138 : vector<4x128xf32>
    %c0_60 = arith.constant 0 : index
    %c0_61 = arith.constant 0 : index
    %140 = vector.load %arg23[%c0_60, %c0_61] : memref<4x128xf32, #tpu.memory_space<vmem>>, vector<4x128xf32>
    tpu.vector_store %arg23[%c0_60, %c0_61], %139 {strides = array<i32>} : memref<4x128xf32, #tpu.memory_space<vmem>>, vector<4x128xf32>,
    %141 = arith.truncf %3 : vector<4x4xf32> to vector<4x4xbf16>
    %c0_62 = arith.constant 0 : index
    %c0_63 = arith.constant 0 : index
    %142 = vector.load %arg15[%c0_62, %c0_63] : memref<4x32xbf16, #tpu.memory_space<vmem>>, vector<4x32xbf16>
    %cst_64 = arith.constant dense<0.000000e+00> : vector<4x32xf32>
    %143 = tpu.matmul %141, %142, %cst_64 {dimension_numbers = #tpu.dot_dimension_numbers<[1], [0], [0], [1], [0, 0, 1, 1], [], []>} : vector<4x4xbf16>, vector<4x32xbf16>, vector<4x32xf32> -> vector<4x32xf32>
    %c0_65 = arith.constant 0 : index
    %c0_66 = arith.constant 0 : index
    %144 = vector.load %arg16[%c0_65, %c0_66] : memref<1x32xf32, #tpu.memory_space<vmem>>, vector<1x32xf32>
    %145 = vector.broadcast %144 : vector<1x32xf32> to vector<4x32xf32>
    %146 = arith.addf %143, %145 : vector<4x32xf32>
    %147 = arith.truncf %146 : vector<4x32xf32> to vector<4x32xbf16>
    %c0_67 = arith.constant 0 : index
    %c0_68 = arith.constant 0 : index
    %148 = vector.load %arg17[%c0_67, %c0_68] : memref<32x64xbf16, #tpu.memory_space<vmem>>, vector<32x64xbf16>
    %cst_69 = arith.constant dense<0.000000e+00> : vector<4x64xf32>
    %149 = tpu.matmul %147, %148, %cst_69 {dimension_numbers = #tpu.dot_dimension_numbers<[1], [0], [0], [1], [0, 0, 1, 1], [], []>} : vector<4x32xbf16>, vector<32x64xbf16>, vector<4x64xf32> -> vector<4x64xf32>
    %c0_70 = arith.constant 0 : index
    %c0_71 = arith.constant 0 : index
    %150 = vector.load %arg18[%c0_70, %c0_71] : memref<1x64xf32, #tpu.memory_space<vmem>>, vector<1x64xf32>
    %151 = vector.broadcast %150 : vector<1x64xf32> to vector<4x64xf32>
    %152 = arith.addf %149, %151 : vector<4x64xf32>
    %c0_72 = arith.constant 0 : index
    %c0_73 = arith.constant 0 : index
    %153 = vector.load %arg19[%c0_72, %c0_73] : memref<1x64xf32, #tpu.memory_space<vmem>>, vector<1x64xf32>
    %c0_74 = arith.constant 0 : index
    %c0_75 = arith.constant 0 : index
    %154 = vector.load %arg20[%c0_74, %c0_75] : memref<1x64xf32, #tpu.memory_space<vmem>>, vector<1x64xf32>
    %155 = vector.extract_strided_slice %152 {offsets = [0, 0], sizes = [2, 64], strides = [1, 1]} : vector<4x64xf32> to vector<2x64xf32>
    %cst_76 = arith.constant dense<0.000000e+00> : vector<64xf32>
    %156 = vector.multi_reduction <add>, %155, %cst_76 [0] : vector<2x64xf32> to vector<64xf32>
    %157 = vector.shape_cast %156 : vector<64xf32> to vector<1x64xf32>
    %cst_77 = arith.constant 2.000000e+00 : f32
    %158 = vector.broadcast %cst_77 : f32 to vector<1x64xf32>
    %159 = arith.divf %157, %158 : vector<1x64xf32>
    %160 = vector.broadcast %159 : vector<1x64xf32> to vector<2x64xf32>
    %161 = arith.subf %155, %160 : vector<2x64xf32>
    %162 = arith.mulf %161, %161 : vector<2x64xf32>
    %cst_78 = arith.constant dense<0.000000e+00> : vector<64xf32>
    %163 = vector.multi_reduction <add>, %162, %cst_78 [0] : vector<2x64xf32> to vector<64xf32>
    %164 = vector.shape_cast %163 : vector<64xf32> to vector<1x64xf32>
    %cst_79 = arith.constant 2.000000e+00 : f32
    %165 = vector.broadcast %cst_79 : f32 to vector<1x64xf32>
    %166 = arith.divf %164, %165 : vector<1x64xf32>
    %167 = vector.broadcast %159 : vector<1x64xf32> to vector<2x64xf32>
    %168 = arith.subf %155, %167 : vector<2x64xf32>
    %cst_80 = arith.constant 9.99999974E-6 : f32
    %169 = vector.broadcast %cst_80 : f32 to vector<1x64xf32>
    %170 = arith.addf %166, %169 : vector<1x64xf32>
    %171 = math.rsqrt %170 : vector<1x64xf32>
    %172 = vector.broadcast %171 : vector<1x64xf32> to vector<2x64xf32>
    %173 = arith.mulf %168, %172 : vector<2x64xf32>
    %174 = vector.broadcast %153 : vector<1x64xf32> to vector<2x64xf32>
    %175 = arith.mulf %173, %174 : vector<2x64xf32>
    %176 = vector.broadcast %154 : vector<1x64xf32> to vector<2x64xf32>
    %177 = arith.addf %175, %176 : vector<2x64xf32>
    %cst_81 = arith.constant 0.000000e+00 : f32
    %178 = vector.broadcast %cst_81 : f32 to vector<2x64xf32>
    %179 = arith.maximumf %177, %178 : vector<2x64xf32>
    %180 = vector.extract_strided_slice %152 {offsets = [2, 0], sizes = [2, 64], strides = [1, 1]} : vector<4x64xf32> to vector<2x64xf32>
    %cst_82 = arith.constant dense<0.000000e+00> : vector<64xf32>
    %181 = vector.multi_reduction <add>, %180, %cst_82 [0] : vector<2x64xf32> to vector<64xf32>
    %182 = vector.shape_cast %181 : vector<64xf32> to vector<1x64xf32>
    %cst_83 = arith.constant 2.000000e+00 : f32
    %183 = vector.broadcast %cst_83 : f32 to vector<1x64xf32>
    %184 = arith.divf %182, %183 : vector<1x64xf32>
    %185 = vector.broadcast %184 : vector<1x64xf32> to vector<2x64xf32>
    %186 = arith.subf %180, %185 : vector<2x64xf32>
    %187 = arith.mulf %186, %186 : vector<2x64xf32>
    %cst_84 = arith.constant dense<0.000000e+00> : vector<64xf32>
    %188 = vector.multi_reduction <add>, %187, %cst_84 [0] : vector<2x64xf32> to vector<64xf32>
    %189 = vector.shape_cast %188 : vector<64xf32> to vector<1x64xf32>
    %cst_85 = arith.constant 2.000000e+00 : f32
    %190 = vector.broadcast %cst_85 : f32 to vector<1x64xf32>
    %191 = arith.divf %189, %190 : vector<1x64xf32>
    %192 = vector.broadcast %184 : vector<1x64xf32> to vector<2x64xf32>
    %193 = arith.subf %180, %192 : vector<2x64xf32>
    %cst_86 = arith.constant 9.99999974E-6 : f32
    %194 = vector.broadcast %cst_86 : f32 to vector<1x64xf32>
    %195 = arith.addf %191, %194 : vector<1x64xf32>
    %196 = math.rsqrt %195 : vector<1x64xf32>
    %197 = vector.broadcast %196 : vector<1x64xf32> to vector<2x64xf32>
    %198 = arith.mulf %193, %197 : vector<2x64xf32>
    %199 = vector.broadcast %153 : vector<1x64xf32> to vector<2x64xf32>
    %200 = arith.mulf %198, %199 : vector<2x64xf32>
    %201 = vector.broadcast %154 : vector<1x64xf32> to vector<2x64xf32>
    %202 = arith.addf %200, %201 : vector<2x64xf32>
    %cst_87 = arith.constant 0.000000e+00 : f32
    %203 = vector.broadcast %cst_87 : f32 to vector<2x64xf32>
    %204 = arith.maximumf %202, %203 : vector<2x64xf32>
    %205 = tpu.concatenate %179, %204 in 0 : vector<2x64xf32>, vector<2x64xf32> -> vector<4x64xf32>
    %206 = arith.truncf %205 : vector<4x64xf32> to vector<4x64xbf16>
    %c0_88 = arith.constant 0 : index
    %c0_89 = arith.constant 0 : index
    %207 = vector.load %arg21[%c0_88, %c0_89] : memref<64x128xbf16, #tpu.memory_space<vmem>>, vector<64x128xbf16>
    %cst_90 = arith.constant dense<0.000000e+00> : vector<4x128xf32>
    %208 = tpu.matmul %206, %207, %cst_90 {dimension_numbers = #tpu.dot_dimension_numbers<[1], [0], [0], [1], [0, 0, 1, 1], [], []>} : vector<4x64xbf16>, vector<64x128xbf16>, vector<4x128xf32> -> vector<4x128xf32>
    %c0_91 = arith.constant 0 : index
    %c0_92 = arith.constant 0 : index
    %209 = vector.load %arg22[%c0_91, %c0_92] : memref<1x128xf32, #tpu.memory_space<vmem>>, vector<1x128xf32>
    %210 = vector.broadcast %209 : vector<1x128xf32> to vector<4x128xf32>
    %211 = arith.addf %208, %210 : vector<4x128xf32>
    %c0_93 = arith.constant 0 : index
    %c0_94 = arith.constant 0 : index
    %212 = vector.load %arg24[%c0_93, %c0_94] : memref<4x128xf32, #tpu.memory_space<vmem>>, vector<4x128xf32>
    tpu.vector_store %arg24[%c0_93, %c0_94], %211 {strides = array<i32>} : memref<4x128xf32, #tpu.memory_space<vmem>>, vector<4x128xf32>,
    return
  }
}

</mosaic_0001>

<llo_original>
// kernel: byol_forward.1
$region0: #{byol_forward.1}
  #allocation0 [shape = 'u32[]', space=smem, size = 0x4, offset = 0x4, fixed_abs, tag = 'smem constant byte address 0x4 - core index']
  #allocation1 [shape = 'u32[144,128]{1,0:T(1,128)}', space=vmem, size = 0x12000, scoped, tag = 'internal scratch']
  %s0 = inlined_call_operand.vmem [shape: f32[4,4,256], index: 0, kind: input, shape index: {}]
  %s1 = inlined_call_operand.vmem [shape: bf16[4,32], index: 1, kind: input, shape index: {}]
  %s2 = inlined_call_operand.vmem [shape: f32[1,32], index: 2, kind: input, shape index: {}]
  %s3 = inlined_call_operand.vmem [shape: bf16[32,64], index: 3, kind: input, shape index: {}]
  %s4 = inlined_call_operand.vmem [shape: f32[1,64], index: 4, kind: input, shape index: {}]
  %s5 = inlined_call_operand.vmem [shape: f32[1,64], index: 5, kind: input, shape index: {}]
  %s6 = inlined_call_operand.vmem [shape: f32[1,64], index: 6, kind: input, shape index: {}]
  %s7 = inlined_call_operand.vmem [shape: bf16[64,16], index: 7, kind: input, shape index: {}]
  %s8 = inlined_call_operand.vmem [shape: f32[1,16], index: 8, kind: input, shape index: {}]
  %s9 = inlined_call_operand.vmem [shape: bf16[16,64], index: 9, kind: input, shape index: {}]
  %s10 = inlined_call_operand.vmem [shape: f32[1,64], index: 10, kind: input, shape index: {}]
  %s11 = inlined_call_operand.vmem [shape: f32[1,64], index: 11, kind: input, shape index: {}]
  %s12 = inlined_call_operand.vmem [shape: f32[1,64], index: 12, kind: input, shape index: {}]
  %s13 = inlined_call_operand.vmem [shape: bf16[64,128], index: 13, kind: input, shape index: {}]
  %s14 = inlined_call_operand.vmem [shape: f32[1,128], index: 14, kind: input, shape index: {}]
  %s15 = inlined_call_operand.vmem [shape: bf16[4,32], index: 15, kind: input, shape index: {}]
  %s16 = inlined_call_operand.vmem [shape: f32[1,32], index: 16, kind: input, shape index: {}]
  %s17 = inlined_call_operand.vmem [shape: bf16[32,64], index: 17, kind: input, shape index: {}]
  %s18 = inlined_call_operand.vmem [shape: f32[1,64], index: 18, kind: input, shape index: {}]
  %s19 = inlined_call_operand.vmem [shape: f32[1,64], index: 19, kind: input, shape index: {}]
  %s20 = inlined_call_operand.vmem [shape: f32[1,64], index: 20, kind: input, shape index: {}]
  %s21 = inlined_call_operand.vmem [shape: bf16[64,128], index: 21, kind: input, shape index: {}]
  %s22 = inlined_call_operand.vmem [shape: f32[1,128], index: 22, kind: input, shape index: {}]
  %s23 = inlined_call_operand.vmem [shape: f32[4,128], index: 23, kind: output, shape index: {0}]
  %s24 = inlined_call_operand.vmem [shape: f32[4,128], index: 24, kind: output, shape index: {1}]
  %25 = xla_tuple %s23, %s24
  %s26 = sld [smem:[#allocation0]]
  $region110: #{byol_forward.1} parent=0
    _
  %s28 = ssub.s32 1, %s26
  %s29 = scalar_select 0, %s28, %s26
  // Predicated region
  $region2: #{byol_forward.1} parent=0 // pred_check
    _
  $region3: #{byol_forward.1} parent=0 // pred_check_branch
    %31 = sbr.rel (0) target = $region5
  $region4: #{byol_forward.1} parent=0 // pred_region
    _
  $region5: #{byol_forward.1} parent=0 // pred_fallthru
    _
  // Predicated region
  $region6: #{byol_forward.1} parent=0 // pred_check
    _
  $region7: #{byol_forward.1} parent=0 // pred_check_branch
    %33 = sbr.rel (0) target = $region9
  $region8: #{byol_forward.1} parent=0 // pred_region
    _
  $region9: #{byol_forward.1} parent=0 // pred_fallthru
    _
  // Predicated region
  $region10: #{byol_forward.1} parent=0 // pred_check
    _
  $region11: #{byol_forward.1} parent=0 // pred_check_branch
    %35 = sbr.rel (0) target = $region13
  $region12: #{byol_forward.1} parent=0 // pred_region
    _
  $region13: #{byol_forward.1} parent=0 // pred_fallthru
    _
  // Predicated region
  $region14: #{byol_forward.1} parent=0 // pred_check
    _
  $region15: #{byol_forward.1} parent=0 // pred_check_branch
    %37 = sbr.rel (0) target = $region17
  $region16: #{byol_forward.1} parent=0 // pred_region
    _
  $region17: #{byol_forward.1} parent=0 // pred_fallthru
    _
  // Predicated region
  $region18: #{byol_forward.1} parent=0 // pred_check
    _
  $region19: #{byol_forward.1} parent=0 // pred_check_branch
    %39 = sbr.rel (0) target = $region21
  $region20: #{byol_forward.1} parent=0 // pred_region
    _
  $region21: #{byol_forward.1} parent=0 // pred_fallthru
    _
  // Predicated region
  $region22: #{byol_forward.1} parent=0 // pred_check
    _
  $region23: #{byol_forward.1} parent=0 // pred_check_branch
    %41 = sbr.rel (0) target = $region25
  $region24: #{byol_forward.1} parent=0 // pred_region
    _
  $region25: #{byol_forward.1} parent=0 // pred_fallthru
    _
  // Predicated region
  $region26: #{byol_forward.1} parent=0 // pred_check
    _
  $region27: #{byol_forward.1} parent=0 // pred_check_branch
    %43 = sbr.rel (0) target = $region29
  $region28: #{byol_forward.1} parent=0 // pred_region
    _
  $region29: #{byol_forward.1} parent=0 // pred_fallthru
    _
  // Predicated region
  $region30: #{byol_forward.1} parent=0 // pred_check
    _
  $region31: #{byol_forward.1} parent=0 // pred_check_branch
    %45 = sbr.rel (0) target = $region33
  $region32: #{byol_forward.1} parent=0 // pred_region
    _
  $region33: #{byol_forward.1} parent=0 // pred_fallthru
    _
  // Predicated region
  $region34: #{byol_forward.1} parent=0 // pred_check
    _
  $region35: #{byol_forward.1} parent=0 // pred_check_branch
    %47 = sbr.rel (0) target = $region37
  $region36: #{byol_forward.1} parent=0 // pred_region
    _
  $region37: #{byol_forward.1} parent=0 // pred_fallthru
    _
  // Predicated region
  $region38: #{byol_forward.1} parent=0 // pred_check
    _
  $region39: #{byol_forward.1} parent=0 // pred_check_branch
    %49 = sbr.rel (0) target = $region41
  $region40: #{byol_forward.1} parent=0 // pred_region
    _
  $region41: #{byol_forward.1} parent=0 // pred_fallthru
    _
  // Predicated region
  $region42: #{byol_forward.1} parent=0 // pred_check
    _
  $region43: #{byol_forward.1} parent=0 // pred_check_branch
    %51 = sbr.rel (0) target = $region45
  $region44: #{byol_forward.1} parent=0 // pred_region
    _
  $region45: #{byol_forward.1} parent=0 // pred_fallthru
    _
  // Predicated region
  $region46: #{byol_forward.1} parent=0 // pred_check
    _
  $region47: #{byol_forward.1} parent=0 // pred_check_branch
    %53 = sbr.rel (0) target = $region49
  $region48: #{byol_forward.1} parent=0 // pred_region
    _
  $region49: #{byol_forward.1} parent=0 // pred_fallthru
    _
  // Predicated region
  $region50: #{byol_forward.1} parent=0 // pred_check
    _
  $region51: #{byol_forward.1} parent=0 // pred_check_branch
    %55 = sbr.rel (0) target = $region53
  $region52: #{byol_forward.1} parent=0 // pred_region
    _
  $region53: #{byol_forward.1} parent=0 // pred_fallthru
    _
  // Predicated region
  $region54: #{byol_forward.1} parent=0 // pred_check
    _
  $region55: #{byol_forward.1} parent=0 // pred_check_branch
    %57 = sbr.rel (0) target = $region57
  $region56: #{byol_forward.1} parent=0 // pred_region
    _
  $region57: #{byol_forward.1} parent=0 // pred_fallthru
    _
  // Predicated region
  $region58: #{byol_forward.1} parent=0 // pred_check
    _
  $region59: #{byol_forward.1} parent=0 // pred_check_branch
    %59 = sbr.rel (0) target = $region61
  $region60: #{byol_forward.1} parent=0 // pred_region
    _
  $region61: #{byol_forward.1} parent=0 // pred_fallthru
    _
  // Predicated region
  $region62: #{byol_forward.1} parent=0 // pred_check
    _
  $region63: #{byol_forward.1} parent=0 // pred_check_branch
    %61 = sbr.rel (0) target = $region65
  $region64: #{byol_forward.1} parent=0 // pred_region
    _
  $region65: #{byol_forward.1} parent=0 // pred_fallthru
    _
  // Predicated region
  $region66: #{byol_forward.1} parent=0 // pred_check
    _
  $region67: #{byol_forward.1} parent=0 // pred_check_branch
    %63 = sbr.rel (0) target = $region69
  $region68: #{byol_forward.1} parent=0 // pred_region
    _
  $region69: #{byol_forward.1} parent=0 // pred_fallthru
    _
  // Predicated region
  $region70: #{byol_forward.1} parent=0 // pred_check
    _
  $region71: #{byol_forward.1} parent=0 // pred_check_branch
    %65 = sbr.rel (0) target = $region73
  $region72: #{byol_forward.1} parent=0 // pred_region
    _
  $region73: #{byol_forward.1} parent=0 // pred_fallthru
    _
  // Predicated region
  $region74: #{byol_forward.1} parent=0 // pred_check
    _
  $region75: #{byol_forward.1} parent=0 // pred_check_branch
    %67 = sbr.rel (0) target = $region77
  $region76: #{byol_forward.1} parent=0 // pred_region
    _
  $region77: #{byol_forward.1} parent=0 // pred_fallthru
    _
  // Predicated region
  $region78: #{byol_forward.1} parent=0 // pred_check
    _
  $region79: #{byol_forward.1} parent=0 // pred_check_branch
    %69 = sbr.rel (0) target = $region81
  $region80: #{byol_forward.1} parent=0 // pred_region
    _
  $region81: #{byol_forward.1} parent=0 // pred_fallthru
    _
  // Predicated region
  $region82: #{byol_forward.1} parent=0 // pred_check
    _
  $region83: #{byol_forward.1} parent=0 // pred_check_branch
    %71 = sbr.rel (0) target = $region85
  $region84: #{byol_forward.1} parent=0 // pred_region
    _
  $region85: #{byol_forward.1} parent=0 // pred_fallthru
    _
  // Predicated region
  $region86: #{byol_forward.1} parent=0 // pred_check
    _
  $region87: #{byol_forward.1} parent=0 // pred_check_branch
    %73 = sbr.rel (0) target = $region89
  $region88: #{byol_forward.1} parent=0 // pred_region
    _
  $region89: #{byol_forward.1} parent=0 // pred_fallthru
    _
  // Predicated region
  $region90: #{byol_forward.1} parent=0 // pred_check
    _
  $region91: #{byol_forward.1} parent=0 // pred_check_branch
    %75 = sbr.rel (0) target = $region93
  $region92: #{byol_forward.1} parent=0 // pred_region
    _
  $region93: #{byol_forward.1} parent=0 // pred_fallthru
    _
  %v77 = vld [vmem:[%s0] sm:$0xff]
  %v78 = vld [vmem:[%s0 + $0x8] sm:$0xff]
  %v79 = vld [vmem:[%s0 + $0x10] sm:$0xff]
  %v80 = vld [vmem:[%s0 + $0x18] sm:$0xff]
  %v85 = vcombine.high %v77, %v77
  %v86 = vcombine.high %v78, %v78
  %v87 = vcombine.high %v79, %v79
  %v88 = vcombine.high %v80, %v80
  %vm93 = vcmask 1043456
  %v94 = vsel %vm93, %v77, 0.0
  %v95 = vsel %vm93, %v85, 0.0
  %v96 = vadd.f32 %v94, %v95
  %97 = vadd.xlane.f32.xlu0 %v96
  %v98 = vpop.xlane.xlu0 %97
  %v99 = vsel %vm93, %v78, 0.0
  %v100 = vsel %vm93, %v86, 0.0
  %v101 = vadd.f32 %v99, %v100
  %102 = vadd.xlane.f32.xlu0 %v101
  %v103 = vpop.xlane.xlu0 %102
  %v104 = vsel %vm93, %v79, 0.0
  %v105 = vsel %vm93, %v87, 0.0
  %v106 = vadd.f32 %v104, %v105
  %107 = vadd.xlane.f32.xlu0 %v106
  %v108 = vpop.xlane.xlu0 %107
  %v109 = vsel %vm93, %v80, 0.0
  %v110 = vsel %vm93, %v88, 0.0
  %v111 = vadd.f32 %v109, %v110
  %112 = vadd.xlane.f32.xlu0 %v111
  %v113 = vpop.xlane.xlu0 %112
  %v114 = vrcp.pop 256.0
  %v115 = vmul.f32 %v98, %v114
  %v116 = vmul.f32 %v103, %v114
  %v117 = vmul.f32 %v108, %v114
  %v118 = vmul.f32 %v113, %v114
  %v119 = vpack.c.bf16 %v115, %v115
  %v120 = vpack.c.bf16 %v116, %v116
  %v121 = vpack.c.bf16 %v117, %v117
  %v122 = vpack.c.bf16 %v118, %v118
  %v123 = vld [vmem:[%s1] sm:$0x3]
  %v124 = vld [vmem:[%s2] sm:$0x1]
  %v126 = vlaneseq
  %v127 = vshrl.u32 %v126, 7
  %v128 = vsub.s32 0, %v127
  %v129 = vrot.slane %v124, %v128
  %v135 = vunpack.c.l.b16 %v119
  %v136 = vunpack.c.l.b16 %v120
  %v137 = vunpack.c.l.b16 %v121
  %v138 = vunpack.c.l.b16 %v122
  %v139 = vlaneseq
  %v140 = vand.u32 %v139, 127
  %v141 = vlaneseq
  %v142 = vshrl.u32 %v141, 7
  %v143 = vsub.s32 %v140, %v142
  %v144 = vrot.slane %v135, %v143
  %v145 = vlaneseq
  %v146 = vshrl.u32 %v145, 7
  %v147 = vsub.s32 %v140, %v146
  %v148 = vrot.slane %v136, %v147
  %v149 = vlaneseq
  %v150 = vshrl.u32 %v149, 7
  %v151 = vsub.s32 %v140, %v150
  %v152 = vrot.slane %v137, %v151
  %v153 = vlaneseq
  %v154 = vshrl.u32 %v153, 7
  %v155 = vsub.s32 %v140, %v154
  %v156 = vrot.slane %v138, %v155
  %vm157 = vcmask 1041409
  %v158 = vsel %vm157, %v148, %v144
  %vm159 = vcmask 1042434
  %v160 = vsel %vm159, %v152, %v158
  %vm161 = vcmask 1043459
  %v162 = vsel %vm161, %v156, %v160
  %v163 = vpack.c.b16 %v162, %v162
  %vm164 = vcmask 31744
  %v166 = vsel %vm164, %v163, 0
  %vm168 = vcmask 1041408
  %v170 = vsel %vm168, %v123, 0
  %172 = vmatprep.subr.bf16.mxu0 0
  %173 = vmatpush1.bf16.msra.mxu0 %v170
  %174 = vmatprep.subr.bf16.mxu0 0
  %175 = vmatpush1.bf16.msra.mxu0 0
  %176 = vmatprep.subr.bf16.mxu0 0
  %177 = vmatpush1.bf16.msra.mxu0 0
  %178 = vmatprep.subr.bf16.mxu0 0
  %179 = vmatpush1.bf16.msra.mxu0 0
  %180 = vmatprep.subr.bf16.mxu0 0
  %181 = vmatpush1.bf16.msra.mxu0 0
  %182 = vmatprep.subr.bf16.mxu0 0
  %183 = vmatpush1.bf16.msra.mxu0 0
  %184 = vmatprep.subr.bf16.mxu0 0
  %185 = vmatpush1.bf16.msra.mxu0 0
  %186 = vmatprep.subr.bf16.mxu0 0
  %187 = vmatpush1.bf16.msra.mxu0 0
  %188 = vmatprep.subr.bf16.mxu0 0
  %189 = vmatpush1.bf16.msra.mxu0 0
  %190 = vmatprep.subr.bf16.mxu0 0
  %191 = vmatpush1.bf16.msra.mxu0 0
  %192 = vmatprep.subr.bf16.mxu0 0
  %193 = vmatpush1.bf16.msra.mxu0 0
  %194 = vmatprep.subr.bf16.mxu0 0
  %195 = vmatpush1.bf16.msra.mxu0 0
  %196 = vmatprep.subr.bf16.mxu0 0
  %197 = vmatpush1.bf16.msra.mxu0 0
  %198 = vmatprep.subr.bf16.mxu0 0
  %199 = vmatpush1.bf16.msra.mxu0 0
  %200 = vmatprep.subr.bf16.mxu0 0
  %201 = vmatpush1.bf16.msra.mxu0 0
  %202 = vmatprep.subr.bf16.mxu0 0
  %203 = vmatpush1.bf16.msra.mxu0 0
  %204 = vmatprep.mubr.bf16.mxu0 0
  %205 = vmatmul.mubr.bf16.gmra.mrb[0].mxu0 %v166
  %v206 = vpop.f32.mrb[0].mxu0
  %v207 = vadd.f32 %v129, %v206
  %v208 = vpop.f32.mrb[0].mxu0
  %v209 = vpop.f32.mrb[0].mxu0
  %v210 = vpop.f32.mrb[0].mxu0
  %211 = vdwg.mxu0
  %v212 = vpack.c.bf16 %v207, %v207
  %v213 = vld [vmem:[%s3] sm:$0xf]
  %v214 = vld [vmem:[%s3 + $0x4] sm:$0xf]
  %v215 = vld [vmem:[%s3 + $0x8] sm:$0xf]
  %v216 = vld [vmem:[%s3 + $0xc] sm:$0xf]
  %v217 = vld [vmem:[%s4] sm:$0x1]
  %v219 = vlaneseq
  %v220 = vshrl.u32 %v219, 7
  %v221 = vsub.s32 0, %v220
  %v222 = vrot.slane %v217, %v221
  %v228 = vunpack.c.l.b16 %v213
  %v229 = vunpack.c.l.b16 %v214
  %v230 = vunpack.c.l.b16 %v215
  %v231 = vunpack.c.l.b16 %v216
  %v232 = vpack.c.b16 %v229, %v228
  %v233 = vpack.c.b16 %v231, %v230
  %vm236 = vcmask 261120
  %v238 = vsel %vm236, %v212, 0
  %240 = vmatprep.subr.bf16.mxu0 0
  %241 = vmatpush1.bf16.msra.mxu0 %v232
  %242 = vmatprep.subr.bf16.mxu0 0
  %243 = vmatpush1.bf16.msra.mxu0 %v233
  %244 = vmatprep.subr.bf16.mxu0 0
  %245 = vmatpush1.bf16.msra.mxu0 0
  %246 = vmatprep.subr.bf16.mxu0 0
  %247 = vmatpush1.bf16.msra.mxu0 0
  %248 = vmatprep.subr.bf16.mxu0 0
  %249 = vmatpush1.bf16.msra.mxu0 0
  %250 = vmatprep.subr.bf16.mxu0 0
  %251 = vmatpush1.bf16.msra.mxu0 0
  %252 = vmatprep.subr.bf16.mxu0 0
  %253 = vmatpush1.bf16.msra.mxu0 0
  %254 = vmatprep.subr.bf16.mxu0 0
  %255 = vmatpush1.bf16.msra.mxu0 0
  %256 = vmatprep.subr.bf16.mxu0 0
  %257 = vmatpush1.bf16.msra.mxu0 0
  %258 = vmatprep.subr.bf16.mxu0 0
  %259 = vmatpush1.bf16.msra.mxu0 0
  %260 = vmatprep.subr.bf16.mxu0 0
  %261 = vmatpush1.bf16.msra.mxu0 0
  %262 = vmatprep.subr.bf16.mxu0 0
  %263 = vmatpush1.bf16.msra.mxu0 0
  %264 = vmatprep.subr.bf16.mxu0 0
  %265 = vmatpush1.bf16.msra.mxu0 0
  %266 = vmatprep.subr.bf16.mxu0 0
  %267 = vmatpush1.bf16.msra.mxu0 0
  %268 = vmatprep.subr.bf16.mxu0 0
  %269 = vmatpush1.bf16.msra.mxu0 0
  %270 = vmatprep.subr.bf16.mxu0 0
  %271 = vmatpush1.bf16.msra.mxu0 0
  %272 = vmatprep.mubr.bf16.mxu0 0
  %273 = vmatmul.mubr.bf16.gmra.mrb[0].mxu0 %v238
  %v274 = vpop.f32.mrb[0].mxu0
  %v275 = vadd.f32 %v222, %v274
  %v276 = vpop.f32.mrb[0].mxu0
  %v277 = vpop.f32.mrb[0].mxu0
  %v278 = vpop.f32.mrb[0].mxu0
  %279 = vdwg.mxu0
  %v280 = vld [vmem:[%s5] sm:$0x1]
  %v281 = vld [vmem:[%s6] sm:$0x1]
  %vm282 = vcmask 517120
  %v283 = vsel %vm282, %v275, 0.0
  %v284 = vrot.slane %v283, 4
  %v285 = vadd.f32 %v283, %v284
  %v286 = vrot.slane %v285, 2
  %v287 = vadd.f32 %v285, %v286
  %v288 = vrot.slane %v287, 1
  %v289 = vadd.f32 %v287, %v288
  %v290 = vrcp.pop 2.0
  %v291 = vmul.f32 %v289, %v290
  %v292 = vsub.f32 %v275, %v291
  %v293 = vmul.f32 %v292, %v292
  %v294 = vsel %vm282, %v293, 0.0
  %v295 = vrot.slane %v294, 4
  %v296 = vadd.f32 %v294, %v295
  %v297 = vrot.slane %v296, 2
  %v298 = vadd.f32 %v296, %v297
  %v299 = vrot.slane %v298, 1
  %v300 = vadd.f32 %v298, %v299
  %v301 = vmul.f32 %v300, %v290
  %v302 = vadd.f32 %v301, 1e-05
  %v303 = vrsqrt.pop %v302
  %v304 = vmul.f32 %v292, %v303
  %v306 = vlaneseq
  %v307 = vshrl.u32 %v306, 7
  %v308 = vsub.s32 0, %v307
  %v309 = vrot.slane %v280, %v308
  %v311 = vmul.f32 %v304, %v309
  %v313 = vlaneseq
  %v314 = vshrl.u32 %v313, 7
  %v315 = vsub.s32 0, %v314
  %v316 = vrot.slane %v281, %v315
  %v318 = vadd.f32 %v311, %v316
  %v319 = vmax.f32 %v318, 0.0
  %v321 = vrot.slane %v275, 2
  %v323 = vsel %vm282, %v321, 0.0
  %v324 = vrot.slane %v323, 4
  %v325 = vadd.f32 %v323, %v324
  %v326 = vrot.slane %v325, 2
  %v327 = vadd.f32 %v325, %v326
  %v328 = vrot.slane %v327, 1
  %v329 = vadd.f32 %v327, %v328
  %v330 = vmul.f32 %v329, %v290
  %v331 = vsub.f32 %v275, %v330
  %v332 = vmul.f32 %v331, %v331
  %v334 = vrot.slane %v332, 2
  %v336 = vsel %vm282, %v334, 0.0
  %v337 = vrot.slane %v336, 4
  %v338 = vadd.f32 %v336, %v337
  %v339 = vrot.slane %v338, 2
  %v340 = vadd.f32 %v338, %v339
  %v341 = vrot.slane %v340, 1
  %v342 = vadd.f32 %v340, %v341
  %v343 = vmul.f32 %v342, %v290
  %v344 = vadd.f32 %v343, 1e-05
  %v345 = vrsqrt.pop %v344
  %v346 = vmul.f32 %v331, %v345
  %v347 = vmul.f32 %v346, %v309
  %v348 = vadd.f32 %v347, %v316
  %v349 = vmax.f32 %v348, 0.0
  %v350 = vsel %vm168, %v319, %v349
  %v351 = vpack.c.bf16 %v350, %v350
  %v352 = vld [vmem:[%s7] sm:$0xf]
  %v353 = vld [vmem:[%s7 + $0x4] sm:$0xf]
  %v354 = vld [vmem:[%s7 + $0x8] sm:$0xf]
  %v355 = vld [vmem:[%s7 + $0xc] sm:$0xf]
  %v356 = vld [vmem:[%s7 + $0x10] sm:$0xf]
  %v357 = vld [vmem:[%s7 + $0x14] sm:$0xf]
  %v358 = vld [vmem:[%s7 + $0x18] sm:$0xf]
  %v359 = vld [vmem:[%s7 + $0x1c] sm:$0xf]
  %v360 = vld [vmem:[%s8] sm:$0x1]
  %v362 = vlaneseq
  %v363 = vshrl.u32 %v362, 7
  %v364 = vsub.s32 0, %v363
  %v365 = vrot.slane %v360, %v364
  %v375 = vunpack.c.l.b16 %v352
  %v376 = vunpack.c.l.b16 %v353
  %v377 = vunpack.c.l.b16 %v354
  %v378 = vunpack.c.l.b16 %v355
  %v379 = vunpack.c.l.b16 %v356
  %v380 = vunpack.c.l.b16 %v357
  %v381 = vunpack.c.l.b16 %v358
  %v382 = vunpack.c.l.b16 %v359
  %v383 = vpack.c.b16 %v376, %v375
  %v384 = vpack.c.b16 %v378, %v377
  %v385 = vpack.c.b16 %v380, %v379
  %v386 = vpack.c.b16 %v382, %v381
  %vm391 = vcmask 523264
  %v393 = vsel %vm391, %v351, 0
  %395 = vmatprep.subr.bf16.mxu0 0
  %396 = vmatpush1.bf16.msra.mxu0 %v383
  %397 = vmatprep.subr.bf16.mxu0 0
  %398 = vmatpush1.bf16.msra.mxu0 %v384
  %399 = vmatprep.subr.bf16.mxu0 0
  %400 = vmatpush1.bf16.msra.mxu0 %v385
  %401 = vmatprep.subr.bf16.mxu0 0
  %402 = vmatpush1.bf16.msra.mxu0 %v386
  %403 = vmatprep.subr.bf16.mxu0 0
  %404 = vmatpush1.bf16.msra.mxu0 0
  %405 = vmatprep.subr.bf16.mxu0 0
  %406 = vmatpush1.bf16.msra.mxu0 0
  %407 = vmatprep.subr.bf16.mxu0 0
  %408 = vmatpush1.bf16.msra.mxu0 0
  %409 = vmatprep.subr.bf16.mxu0 0
  %410 = vmatpush1.bf16.msra.mxu0 0
  %411 = vmatprep.subr.bf16.mxu0 0
  %412 = vmatpush1.bf16.msra.mxu0 0
  %413 = vmatprep.subr.bf16.mxu0 0
  %414 = vmatpush1.bf16.msra.mxu0 0
  %415 = vmatprep.subr.bf16.mxu0 0
  %416 = vmatpush1.bf16.msra.mxu0 0
  %417 = vmatprep.subr.bf16.mxu0 0
  %418 = vmatpush1.bf16.msra.mxu0 0
  %419 = vmatprep.subr.bf16.mxu0 0
  %420 = vmatpush1.bf16.msra.mxu0 0
  %421 = vmatprep.subr.bf16.mxu0 0
  %422 = vmatpush1.bf16.msra.mxu0 0
  %423 = vmatprep.subr.bf16.mxu0 0
  %424 = vmatpush1.bf16.msra.mxu0 0
  %425 = vmatprep.subr.bf16.mxu0 0
  %426 = vmatpush1.bf16.msra.mxu0 0
  %427 = vmatprep.mubr.bf16.mxu0 0
  %428 = vmatmul.mubr.bf16.gmra.mrb[0].mxu0 %v393
  %v429 = vpop.f32.mrb[0].mxu0
  %v430 = vadd.f32 %v365, %v429
  %v431 = vpop.f32.mrb[0].mxu0
  %v432 = vpop.f32.mrb[0].mxu0
  %v433 = vpop.f32.mrb[0].mxu0
  %434 = vdwg.mxu0
  %v435 = vpack.c.bf16 %v430, %v430
  %v436 = vld [vmem:[%s9] sm:$0xf]
  %v437 = vld [vmem:[%s9 + $0x4] sm:$0xf]
  %v438 = vld [vmem:[%s10] sm:$0x1]
  %v440 = vlaneseq
  %v441 = vshrl.u32 %v440, 7
  %v442 = vsub.s32 0, %v441
  %v443 = vrot.slane %v438, %v442
  %v447 = vunpack.c.l.b16 %v436
  %v448 = vunpack.c.l.b16 %v437
  %v449 = vpack.c.b16 %v448, %v447
  %vm451 = vcmask 130048
  %v453 = vsel %vm451, %v435, 0
  %455 = vmatprep.subr.bf16.mxu0 0
  %456 = vmatpush1.bf16.msra.mxu0 %v449
  %457 = vmatprep.subr.bf16.mxu0 0
  %458 = vmatpush1.bf16.msra.mxu0 0
  %459 = vmatprep.subr.bf16.mxu0 0
  %460 = vmatpush1.bf16.msra.mxu0 0
  %461 = vmatprep.subr.bf16.mxu0 0
  %462 = vmatpush1.bf16.msra.mxu0 0
  %463 = vmatprep.subr.bf16.mxu0 0
  %464 = vmatpush1.bf16.msra.mxu0 0
  %465 = vmatprep.subr.bf16.mxu0 0
  %466 = vmatpush1.bf16.msra.mxu0 0
  %467 = vmatprep.subr.bf16.mxu0 0
  %468 = vmatpush1.bf16.msra.mxu0 0
  %469 = vmatprep.subr.bf16.mxu0 0
  %470 = vmatpush1.bf16.msra.mxu0 0
  %471 = vmatprep.subr.bf16.mxu0 0
  %472 = vmatpush1.bf16.msra.mxu0 0
  %473 = vmatprep.subr.bf16.mxu0 0
  %474 = vmatpush1.bf16.msra.mxu0 0
  %475 = vmatprep.subr.bf16.mxu0 0
  %476 = vmatpush1.bf16.msra.mxu0 0
  %477 = vmatprep.subr.bf16.mxu0 0
  %478 = vmatpush1.bf16.msra.mxu0 0
  %479 = vmatprep.subr.bf16.mxu0 0
  %480 = vmatpush1.bf16.msra.mxu0 0
  %481 = vmatprep.subr.bf16.mxu0 0
  %482 = vmatpush1.bf16.msra.mxu0 0
  %483 = vmatprep.subr.bf16.mxu0 0
  %484 = vmatpush1.bf16.msra.mxu0 0
  %485 = vmatprep.subr.bf16.mxu0 0
  %486 = vmatpush1.bf16.msra.mxu0 0
  %487 = vmatprep.mubr.bf16.mxu0 0
  %488 = vmatmul.mubr.bf16.gmra.mrb[0].mxu0 %v453
  %v489 = vpop.f32.mrb[0].mxu0
  %v490 = vadd.f32 %v443, %v489
  %v491 = vpop.f32.mrb[0].mxu0
  %v492 = vpop.f32.mrb[0].mxu0
  %v493 = vpop.f32.mrb[0].mxu0
  %494 = vdwg.mxu0
  %v495 = vld [vmem:[%s11] sm:$0x1]
  %v496 = vld [vmem:[%s12] sm:$0x1]
  %v497 = vsel %vm282, %v490, 0.0
  %v498 = vrot.slane %v497, 4
  %v499 = vadd.f32 %v497, %v498
  %v500 = vrot.slane %v499, 2
  %v501 = vadd.f32 %v499, %v500
  %v502 = vrot.slane %v501, 1
  %v503 = vadd.f32 %v501, %v502
  %v504 = vmul.f32 %v503, %v290
  %v505 = vsub.f32 %v490, %v504
  %v506 = vmul.f32 %v505, %v505
  %v507 = vsel %vm282, %v506, 0.0
  %v508 = vrot.slane %v507, 4
  %v509 = vadd.f32 %v507, %v508
  %v510 = vrot.slane %v509, 2
  %v511 = vadd.f32 %v509, %v510
  %v512 = vrot.slane %v511, 1
  %v513 = vadd.f32 %v511, %v512
  %v514 = vmul.f32 %v513, %v290
  %v515 = vadd.f32 %v514, 1e-05
  %v516 = vrsqrt.pop %v515
  %v517 = vmul.f32 %v505, %v516
  %v519 = vlaneseq
  %v520 = vshrl.u32 %v519, 7
  %v521 = vsub.s32 0, %v520
  %v522 = vrot.slane %v495, %v521
  %v524 = vmul.f32 %v517, %v522
  %v526 = vlaneseq
  %v527 = vshrl.u32 %v526, 7
  %v528 = vsub.s32 0, %v527
  %v529 = vrot.slane %v496, %v528
  %v531 = vadd.f32 %v524, %v529
  %v532 = vmax.f32 %v531, 0.0
  %v534 = vrot.slane %v490, 2
  %v536 = vsel %vm282, %v534, 0.0
  %v537 = vrot.slane %v536, 4
  %v538 = vadd.f32 %v536, %v537
  %v539 = vrot.slane %v538, 2
  %v540 = vadd.f32 %v538, %v539
  %v541 = vrot.slane %v540, 1
  %v542 = vadd.f32 %v540, %v541
  %v543 = vmul.f32 %v542, %v290
  %v544 = vsub.f32 %v490, %v543
  %v545 = vmul.f32 %v544, %v544
  %v547 = vrot.slane %v545, 2
  %v549 = vsel %vm282, %v547, 0.0
  %v550 = vrot.slane %v549, 4
  %v551 = vadd.f32 %v549, %v550
  %v552 = vrot.slane %v551, 2
  %v553 = vadd.f32 %v551, %v552
  %v554 = vrot.slane %v553, 1
  %v555 = vadd.f32 %v553, %v554
  %v556 = vmul.f32 %v555, %v290
  %v557 = vadd.f32 %v556, 1e-05
  %v558 = vrsqrt.pop %v557
  %v559 = vmul.f32 %v544, %v558
  %v560 = vmul.f32 %v559, %v522
  %v561 = vadd.f32 %v560, %v529
  %v562 = vmax.f32 %v561, 0.0
  %v563 = vsel %vm168, %v532, %v562
  %v564 = vpack.c.bf16 %v563, %v563
  %v565 = vld [vmem:[%s13] sm:$0xf]
  %v566 = vld [vmem:[%s13 + $0x4] sm:$0xf]
  %v567 = vld [vmem:[%s13 + $0x8] sm:$0xf]
  %v568 = vld [vmem:[%s13 + $0xc] sm:$0xf]
  %v569 = vld [vmem:[%s13 + $0x10] sm:$0xf]
  %v570 = vld [vmem:[%s13 + $0x14] sm:$0xf]
  %v571 = vld [vmem:[%s13 + $0x18] sm:$0xf]
  %v572 = vld [vmem:[%s13 + $0x1c] sm:$0xf]
  %v573 = vld [vmem:[%s14] sm:$0x1]
  %v575 = vlaneseq
  %v576 = vshrl.u32 %v575, 7
  %v577 = vsub.s32 0, %v576
  %v578 = vrot.slane %v573, %v577
  %v588 = vunpack.c.l.b16 %v565
  %v589 = vunpack.c.l.b16 %v566
  %v590 = vunpack.c.l.b16 %v567
  %v591 = vunpack.c.l.b16 %v568
  %v592 = vunpack.c.l.b16 %v569
  %v593 = vunpack.c.l.b16 %v570
  %v594 = vunpack.c.l.b16 %v571
  %v595 = vunpack.c.l.b16 %v572
  %v596 = vpack.c.b16 %v589, %v588
  %v597 = vpack.c.b16 %v591, %v590
  %v598 = vpack.c.b16 %v593, %v592
  %v599 = vpack.c.b16 %v595, %v594
  %v605 = vsel %vm391, %v564, 0
  %607 = vmatprep.subr.bf16.mxu0 0
  %608 = vmatpush1.bf16.msra.mxu0 %v596
  %609 = vmatprep.subr.bf16.mxu0 0
  %610 = vmatpush1.bf16.msra.mxu0 %v597
  %611 = vmatprep.subr.bf16.mxu0 0
  %612 = vmatpush1.bf16.msra.mxu0 %v598
  %613 = vmatprep.subr.bf16.mxu0 0
  %614 = vmatpush1.bf16.msra.mxu0 %v599
  %615 = vmatprep.subr.bf16.mxu0 0
  %616 = vmatpush1.bf16.msra.mxu0 0
  %617 = vmatprep.subr.bf16.mxu0 0
  %618 = vmatpush1.bf16.msra.mxu0 0
  %619 = vmatprep.subr.bf16.mxu0 0
  %620 = vmatpush1.bf16.msra.mxu0 0
  %621 = vmatprep.subr.bf16.mxu0 0
  %622 = vmatpush1.bf16.msra.mxu0 0
  %623 = vmatprep.subr.bf16.mxu0 0
  %624 = vmatpush1.bf16.msra.mxu0 0
  %625 = vmatprep.subr.bf16.mxu0 0
  %626 = vmatpush1.bf16.msra.mxu0 0
  %627 = vmatprep.subr.bf16.mxu0 0
  %628 = vmatpush1.bf16.msra.mxu0 0
  %629 = vmatprep.subr.bf16.mxu0 0
  %630 = vmatpush1.bf16.msra.mxu0 0
  %631 = vmatprep.subr.bf16.mxu0 0
  %632 = vmatpush1.bf16.msra.mxu0 0
  %633 = vmatprep.subr.bf16.mxu0 0
  %634 = vmatpush1.bf16.msra.mxu0 0
  %635 = vmatprep.subr.bf16.mxu0 0
  %636 = vmatpush1.bf16.msra.mxu0 0
  %637 = vmatprep.subr.bf16.mxu0 0
  %638 = vmatpush1.bf16.msra.mxu0 0
  %639 = vmatprep.mubr.bf16.mxu0 0
  %640 = vmatmul.mubr.bf16.gmra.mrb[0].mxu0 %v605
  %v641 = vpop.f32.mrb[0].mxu0
  %v642 = vadd.f32 %v578, %v641
  %v643 = vpop.f32.mrb[0].mxu0
  %v644 = vpop.f32.mrb[0].mxu0
  %v645 = vpop.f32.mrb[0].mxu0
  %646 = vdwg.mxu0
  %647 = vst [vmem:[%s23] sm:$0xf] %v642
  %v648 = vld [vmem:[%s15] sm:$0x3]
  %v649 = vld [vmem:[%s16] sm:$0x1]
  %v651 = vlaneseq
  %v652 = vshrl.u32 %v651, 7
  %v653 = vsub.s32 0, %v652
  %v654 = vrot.slane %v649, %v653
  %v657 = vsel %vm168, %v648, 0
  %659 = vmatprep.subr.bf16.mxu0 0
  %660 = vmatpush1.bf16.msra.mxu0 %v657
  %661 = vmatprep.subr.bf16.mxu0 0
  %662 = vmatpush1.bf16.msra.mxu0 0
  %663 = vmatprep.subr.bf16.mxu0 0
  %664 = vmatpush1.bf16.msra.mxu0 0
  %665 = vmatprep.subr.bf16.mxu0 0
  %666 = vmatpush1.bf16.msra.mxu0 0
  %667 = vmatprep.subr.bf16.mxu0 0
  %668 = vmatpush1.bf16.msra.mxu0 0
  %669 = vmatprep.subr.bf16.mxu0 0
  %670 = vmatpush1.bf16.msra.mxu0 0
  %671 = vmatprep.subr.bf16.mxu0 0
  %672 = vmatpush1.bf16.msra.mxu0 0
  %673 = vmatprep.subr.bf16.mxu0 0
  %674 = vmatpush1.bf16.msra.mxu0 0
  %675 = vmatprep.subr.bf16.mxu0 0
  %676 = vmatpush1.bf16.msra.mxu0 0
  %677 = vmatprep.subr.bf16.mxu0 0
  %678 = vmatpush1.bf16.msra.mxu0 0
  %679 = vmatprep.subr.bf16.mxu0 0
  %680 = vmatpush1.bf16.msra.mxu0 0
  %681 = vmatprep.subr.bf16.mxu0 0
  %682 = vmatpush1.bf16.msra.mxu0 0
  %683 = vmatprep.subr.bf16.mxu0 0
  %684 = vmatpush1.bf16.msra.mxu0 0
  %685 = vmatprep.subr.bf16.mxu0 0
  %686 = vmatpush1.bf16.msra.mxu0 0
  %687 = vmatprep.subr.bf16.mxu0 0
  %688 = vmatpush1.bf16.msra.mxu0 0
  %689 = vmatprep.subr.bf16.mxu0 0
  %690 = vmatpush1.bf16.msra.mxu0 0
  %691 = vmatprep.mubr.bf16.mxu0 0
  %692 = vmatmul.mubr.bf16.gmra.mrb[0].mxu0 %v166
  %v693 = vpop.f32.mrb[0].mxu0
  %v694 = vadd.f32 %v654, %v693
  %v695 = vpop.f32.mrb[0].mxu0
  %v696 = vpop.f32.mrb[0].mxu0
  %v697 = vpop.f32.mrb[0].mxu0
  %698 = vdwg.mxu0
  %v699 = vpack.c.bf16 %v694, %v694
  %v700 = vld [vmem:[%s17] sm:$0xf]
  %v701 = vld [vmem:[%s17 + $0x4] sm:$0xf]
  %v702 = vld [vmem:[%s17 + $0x8] sm:$0xf]
  %v703 = vld [vmem:[%s17 + $0xc] sm:$0xf]
  %v704 = vld [vmem:[%s18] sm:$0x1]
  %v706 = vlaneseq
  %v707 = vshrl.u32 %v706, 7
  %v708 = vsub.s32 0, %v707
  %v709 = vrot.slane %v704, %v708
  %v715 = vunpack.c.l.b16 %v700
  %v716 = vunpack.c.l.b16 %v701
  %v717 = vunpack.c.l.b16 %v702
  %v718 = vunpack.c.l.b16 %v703
  %v719 = vpack.c.b16 %v716, %v715
  %v720 = vpack.c.b16 %v718, %v717
  %v724 = vsel %vm236, %v699, 0
  %726 = vmatprep.subr.bf16.mxu0 0
  %727 = vmatpush1.bf16.msra.mxu0 %v719
  %728 = vmatprep.subr.bf16.mxu0 0
  %729 = vmatpush1.bf16.msra.mxu0 %v720
  %730 = vmatprep.subr.bf16.mxu0 0
  %731 = vmatpush1.bf16.msra.mxu0 0
  %732 = vmatprep.subr.bf16.mxu0 0
  %733 = vmatpush1.bf16.msra.mxu0 0
  %734 = vmatprep.subr.bf16.mxu0 0
  %735 = vmatpush1.bf16.msra.mxu0 0
  %736 = vmatprep.subr.bf16.mxu0 0
  %737 = vmatpush1.bf16.msra.mxu0 0
  %738 = vmatprep.subr.bf16.mxu0 0
  %739 = vmatpush1.bf16.msra.mxu0 0
  %740 = vmatprep.subr.bf16.mxu0 0
  %741 = vmatpush1.bf16.msra.mxu0 0
  %742 = vmatprep.subr.bf16.mxu0 0
  %743 = vmatpush1.bf16.msra.mxu0 0
  %744 = vmatprep.subr.bf16.mxu0 0
  %745 = vmatpush1.bf16.msra.mxu0 0
  %746 = vmatprep.subr.bf16.mxu0 0
  %747 = vmatpush1.bf16.msra.mxu0 0
  %748 = vmatprep.subr.bf16.mxu0 0
  %749 = vmatpush1.bf16.msra.mxu0 0
  %750 = vmatprep.subr.bf16.mxu0 0
  %751 = vmatpush1.bf16.msra.mxu0 0
  %752 = vmatprep.subr.bf16.mxu0 0
  %753 = vmatpush1.bf16.msra.mxu0 0
  %754 = vmatprep.subr.bf16.mxu0 0
  %755 = vmatpush1.bf16.msra.mxu0 0
  %756 = vmatprep.subr.bf16.mxu0 0
  %757 = vmatpush1.bf16.msra.mxu0 0
  %758 = vmatprep.mubr.bf16.mxu0 0
  %759 = vmatmul.mubr.bf16.gmra.mrb[0].mxu0 %v724
  %v760 = vpop.f32.mrb[0].mxu0
  %v761 = vadd.f32 %v709, %v760
  %v762 = vpop.f32.mrb[0].mxu0
  %v763 = vpop.f32.mrb[0].mxu0
  %v764 = vpop.f32.mrb[0].mxu0
  %765 = vdwg.mxu0
  %v766 = vld [vmem:[%s19] sm:$0x1]
  %v767 = vld [vmem:[%s20] sm:$0x1]
  %v768 = vsel %vm282, %v761, 0.0
  %v769 = vrot.slane %v768, 4
  %v770 = vadd.f32 %v768, %v769
  %v771 = vrot.slane %v770, 2
  %v772 = vadd.f32 %v770, %v771
  %v773 = vrot.slane %v772, 1
  %v774 = vadd.f32 %v772, %v773
  %v775 = vmul.f32 %v774, %v290
  %v776 = vsub.f32 %v761, %v775
  %v777 = vmul.f32 %v776, %v776
  %v778 = vsel %vm282, %v777, 0.0
  %v779 = vrot.slane %v778, 4
  %v780 = vadd.f32 %v778, %v779
  %v781 = vrot.slane %v780, 2
  %v782 = vadd.f32 %v780, %v781
  %v783 = vrot.slane %v782, 1
  %v784 = vadd.f32 %v782, %v783
  %v785 = vmul.f32 %v784, %v290
  %v786 = vadd.f32 %v785, 1e-05
  %v787 = vrsqrt.pop %v786
  %v788 = vmul.f32 %v776, %v787
  %v790 = vlaneseq
  %v791 = vshrl.u32 %v790, 7
  %v792 = vsub.s32 0, %v791
  %v793 = vrot.slane %v766, %v792
  %v795 = vmul.f32 %v788, %v793
  %v797 = vlaneseq
  %v798 = vshrl.u32 %v797, 7
  %v799 = vsub.s32 0, %v798
  %v800 = vrot.slane %v767, %v799
  %v802 = vadd.f32 %v795, %v800
  %v803 = vmax.f32 %v802, 0.0
  %v805 = vrot.slane %v761, 2
  %v807 = vsel %vm282, %v805, 0.0
  %v808 = vrot.slane %v807, 4
  %v809 = vadd.f32 %v807, %v808
  %v810 = vrot.slane %v809, 2
  %v811 = vadd.f32 %v809, %v810
  %v812 = vrot.slane %v811, 1
  %v813 = vadd.f32 %v811, %v812
  %v814 = vmul.f32 %v813, %v290
  %v815 = vsub.f32 %v761, %v814
  %v816 = vmul.f32 %v815, %v815
  %v818 = vrot.slane %v816, 2
  %v820 = vsel %vm282, %v818, 0.0
  %v821 = vrot.slane %v820, 4
  %v822 = vadd.f32 %v820, %v821
  %v823 = vrot.slane %v822, 2
  %v824 = vadd.f32 %v822, %v823
  %v825 = vrot.slane %v824, 1
  %v826 = vadd.f32 %v824, %v825
  %v827 = vmul.f32 %v826, %v290
  %v828 = vadd.f32 %v827, 1e-05
  %v829 = vrsqrt.pop %v828
  %v830 = vmul.f32 %v815, %v829
  %v831 = vmul.f32 %v830, %v793
  %v832 = vadd.f32 %v831, %v800
  %v833 = vmax.f32 %v832, 0.0
  %v834 = vsel %vm168, %v803, %v833
  %v835 = vpack.c.bf16 %v834, %v834
  %v836 = vld [vmem:[%s21] sm:$0xf]
  %v837 = vld [vmem:[%s21 + $0x4] sm:$0xf]
  %v838 = vld [vmem:[%s21 + $0x8] sm:$0xf]
  %v839 = vld [vmem:[%s21 + $0xc] sm:$0xf]
  %v840 = vld [vmem:[%s21 + $0x10] sm:$0xf]
  %v841 = vld [vmem:[%s21 + $0x14] sm:$0xf]
  %v842 = vld [vmem:[%s21 + $0x18] sm:$0xf]
  %v843 = vld [vmem:[%s21 + $0x1c] sm:$0xf]
  %v844 = vld [vmem:[%s22] sm:$0x1]
  %v846 = vlaneseq
  %v847 = vshrl.u32 %v846, 7
  %v848 = vsub.s32 0, %v847
  %v849 = vrot.slane %v844, %v848
  %v859 = vunpack.c.l.b16 %v836
  %v860 = vunpack.c.l.b16 %v837
  %v861 = vunpack.c.l.b16 %v838
  %v862 = vunpack.c.l.b16 %v839
  %v863 = vunpack.c.l.b16 %v840
  %v864 = vunpack.c.l.b16 %v841
  %v865 = vunpack.c.l.b16 %v842
  %v866 = vunpack.c.l.b16 %v843
  %v867 = vpack.c.b16 %v860, %v859
  %v868 = vpack.c.b16 %v862, %v861
  %v869 = vpack.c.b16 %v864, %v863
  %v870 = vpack.c.b16 %v866, %v865
  %v876 = vsel %vm391, %v835, 0
  %878 = vmatprep.subr.bf16.mxu0 0
  %879 = vmatpush1.bf16.msra.mxu0 %v867
  %880 = vmatprep.subr.bf16.mxu0 0
  %881 = vmatpush1.bf16.msra.mxu0 %v868
  %882 = vmatprep.subr.bf16.mxu0 0
  %883 = vmatpush1.bf16.msra.mxu0 %v869
  %884 = vmatprep.subr.bf16.mxu0 0
  %885 = vmatpush1.bf16.msra.mxu0 %v870
  %886 = vmatprep.subr.bf16.mxu0 0
  %887 = vmatpush1.bf16.msra.mxu0 0
  %888 = vmatprep.subr.bf16.mxu0 0
  %889 = vmatpush1.bf16.msra.mxu0 0
  %890 = vmatprep.subr.bf16.mxu0 0
  %891 = vmatpush1.bf16.msra.mxu0 0
  %892 = vmatprep.subr.bf16.mxu0 0
  %893 = vmatpush1.bf16.msra.mxu0 0
  %894 = vmatprep.subr.bf16.mxu0 0
  %895 = vmatpush1.bf16.msra.mxu0 0
  %896 = vmatprep.subr.bf16.mxu0 0
  %897 = vmatpush1.bf16.msra.mxu0 0
  %898 = vmatprep.subr.bf16.mxu0 0
  %899 = vmatpush1.bf16.msra.mxu0 0
  %900 = vmatprep.subr.bf16.mxu0 0
  %901 = vmatpush1.bf16.msra.mxu0 0
  %902 = vmatprep.subr.bf16.mxu0 0
  %903 = vmatpush1.bf16.msra.mxu0 0
  %904 = vmatprep.subr.bf16.mxu0 0
  %905 = vmatpush1.bf16.msra.mxu0 0
  %906 = vmatprep.subr.bf16.mxu0 0
  %907 = vmatpush1.bf16.msra.mxu0 0
  %908 = vmatprep.subr.bf16.mxu0 0
  %909 = vmatpush1.bf16.msra.mxu0 0
  %910 = vmatprep.mubr.bf16.mxu0 0
  %911 = vmatmul.mubr.bf16.gmra.mrb[0].mxu0 %v876
  %v912 = vpop.f32.mrb[0].mxu0
  %v913 = vadd.f32 %v849, %v912
  %v914 = vpop.f32.mrb[0].mxu0
  %v915 = vpop.f32.mrb[0].mxu0
  %v916 = vpop.f32.mrb[0].mxu0
  %917 = vdwg.mxu0
  %918 = vst [vmem:[%s24] sm:$0xf] %v913
  // Predicated region
  $region94: #{byol_forward.1} parent=0 // pred_check
    _
  $region95: #{byol_forward.1} parent=0 // pred_check_branch
    %920 = sbr.rel (0) target = $region97
  $region96: #{byol_forward.1} parent=0 // pred_region
    _
  $region97: #{byol_forward.1} parent=0 // pred_fallthru
    _
  // Predicated region
  $region98: #{byol_forward.1} parent=0 // pred_check
    _
  $region99: #{byol_forward.1} parent=0 // pred_check_branch
    %922 = sbr.rel (0) target = $region101
  $region100: #{byol_forward.1} parent=0 // pred_region
    _
  $region101: #{byol_forward.1} parent=0 // pred_fallthru
    _
  // Predicated region
  $region102: #{byol_forward.1} parent=0 // pred_check
    _
  $region103: #{byol_forward.1} parent=0 // pred_check_branch
    %924 = sbr.rel (0) target = $region105
  $region104: #{byol_forward.1} parent=0 // pred_region
    _
  $region105: #{byol_forward.1} parent=0 // pred_fallthru
    _
  // Predicated region
  $region106: #{byol_forward.1} parent=0 // pred_check
    _
  $region107: #{byol_forward.1} parent=0 // pred_check_branch
    %926 = sbr.rel (0) target = $region109
  $region108: #{byol_forward.1} parent=0 // pred_region
    _
  $region109: #{byol_forward.1} parent=0 // pred_fallthru
    _

</llo_original>
